<compile_context>
chip_gen: v5e
topology: v5e:2x2
jax: 0.10.0
libtpu: 0.0.40
codegen_flags: <defaults>
</compile_context>

<pallas_src>
import jax
import jax.numpy as jnp
from jax.experimental import pallas as pl
from jax.experimental.pallas import tpu as pltpu


def _gcn_dgi_kernel(seq_ref, adj_ref, w_ref, b_ref, alpha_ref, out_ref, acc_ref):
    # seq_ref:   (tk, F_in)     VMEM   (batch dim squeezed by BlockSpec)
    # adj_ref:   (tm, tk)       VMEM
    # w_ref:     (F_in, F_pad)  VMEM   (pre-transposed, zero-padded Linear weight)
    # b_ref:     (1, F_pad)     VMEM   (zero-padded bias)
    # alpha_ref: (1,)           SMEM   (PReLU shared slope, scalar path)
    # out_ref:   (tm, F_pad)    VMEM
    # acc_ref:   (tm, F_pad)    VMEM f32 scratch (k-reduction accumulator)
    k = pl.program_id(2)

    @pl.when(k == 0)
    def _():
        # Fold the bias into the accumulator init (kept out of the k loop).
        acc_ref[...] = jnp.broadcast_to(b_ref[...], acc_ref.shape)

    # Feature transform first: wide, lane-dense intermediate (tk, F_pad).
    fts = jnp.dot(seq_ref[...], w_ref[...],
                  preferred_element_type=jnp.float32).astype(seq_ref.dtype)
    # Graph aggregation for this (row, k) tile, f32 accumulation.
    acc_ref[...] += jnp.dot(adj_ref[...], fts,
                            preferred_element_type=jnp.float32)

    @pl.when(k == pl.num_programs(2) - 1)
    def _():
        o = acc_ref[...]
        alpha = alpha_ref[0]
        out_ref[...] = jnp.where(o >= 0, o, alpha * o).astype(out_ref.dtype)


def gcn_dgi_forward(seq, adj, weight, bias, alpha, *,
                    compute_dtype=jnp.float32, tile_m=256, tile_k=256):
    """seq: (B, N, F_in), adj: (B, N, N), weight: (F_out, F_in),
    bias: (F_out,), alpha: scalar. Returns (B, N, F_out) float32."""
    B, N, F_in = seq.shape
    F_out = weight.shape[0]
    F_pad = pl.cdiv(F_out, 128) * 128          # lane-dense output width

    # Row / contraction tiles; fall back to whole-dim blocks if not divisible.
    tm = tile_m if (N % tile_m == 0) else N
    tk = tile_k if (N % tile_k == 0) else N

    # Parameter prep hoisted out of the kernel (done once by XLA).
    w_t = jnp.asarray(weight, jnp.float32).T                      # (F_in, F_out)
    w_pad = jnp.zeros((F_in, F_pad), jnp.float32).at[:, :F_out].set(w_t)
    b_pad = jnp.zeros((1, F_pad), jnp.float32).at[0, :F_out].set(
        jnp.asarray(bias, jnp.float32))
    alpha1d = jnp.asarray(alpha, jnp.float32).reshape(1)

    seq_c = seq.astype(compute_dtype)
    adj_c = adj.astype(compute_dtype)
    w_c = w_pad.astype(compute_dtype)

    out_padded = pl.pallas_call(
        _gcn_dgi_kernel,
        out_shape=jax.ShapeDtypeStruct((B, N, F_pad), jnp.float32),
        grid_spec=pltpu.PrefetchScalarGridSpec(
            num_scalar_prefetch=0,
            grid=(B, N // tm, N // tk),
            in_specs=[
                pl.BlockSpec((None, tk, F_in), lambda b, i, k: (b, k, 0)),
                pl.BlockSpec((None, tm, tk), lambda b, i, k: (b, i, k)),
                pl.BlockSpec((F_in, F_pad), lambda b, i, k: (0, 0)),
                pl.BlockSpec((1, F_pad), lambda b, i, k: (0, 0)),
                pl.BlockSpec(memory_space=pltpu.MemorySpace.SMEM),
            ],
            out_specs=pl.BlockSpec((None, tm, F_pad), lambda b, i, k: (b, i, 0)),
            scratch_shapes=[pltpu.VMEM((tm, F_pad), jnp.float32)],
        ),
        compiler_params=pltpu.CompilerParams(
            dimension_semantics=("parallel", "parallel", "arbitrary")),
    )(seq_c, adj_c, w_c, b_pad, alpha1d)

    return out_padded[..., :F_out]


def _xavier_uniform(key, out_ft, in_ft):
    # matches torch.nn.init.xavier_uniform_ for a (out_ft, in_ft) weight
    limit = jnp.sqrt(6.0 / (in_ft + out_ft))
    return jax.random.uniform(key, (out_ft, in_ft), jnp.float32,
                              minval=-limit, maxval=limit)


if __name__ == "__main__":
    # Small shapes consistent with the module's forward: batch=2, nodes=16,
    # in_ft=8, out_ft=32.
    B, N, F_in, F_out = 2, 16, 8, 32

    key = jax.random.PRNGKey(0)
    k_seq, k_adj, k_w = jax.random.split(key, 3)

    seq = jax.random.normal(k_seq, (B, N, F_in), jnp.float32)
    adj_raw = jax.random.uniform(k_adj, (B, N, N), jnp.float32)
    # symmetric row-normalized adjacency (typical GCN input); any dense adj works
    adj_sym = 0.5 * (adj_raw + jnp.swapaxes(adj_raw, 1, 2))
    adj = adj_sym / jnp.sum(adj_sym, axis=-1, keepdims=True)

    # Deterministic parameter init mirroring GCN_DGI.__init__ / weights_init
    weight = _xavier_uniform(k_w, F_out, F_in)      # fc.weight (xavier_uniform)
    bias = jnp.zeros((F_out,), jnp.float32)         # bias filled with 0.0
    alpha = jnp.float32(0.25)                       # nn.PReLU default slope

    # Reference in plain JAX (same op order as the PyTorch module), f32.
    ref_fts = jnp.einsum("bnf,of->bno", seq, weight,
                         precision=jax.lax.Precision.HIGHEST)
    ref = jnp.einsum("bnm,bmo->bno", adj, ref_fts,
                     precision=jax.lax.Precision.HIGHEST) + bias
    ref = jnp.where(ref >= 0, ref, alpha * ref)

    # Default path: f32 MXU inputs, f32 accumulation (matches reference order).
    out = gcn_dgi_forward(seq, adj, weight, bias, alpha)
    jax.block_until_ready(out)
    assert out.shape == (B, N, F_out)
    assert jnp.allclose(out, ref, atol=1e-4, rtol=1e-4)

    # Optional fast path: bf16 MXU operands with f32 accumulation
    # (halves adj HBM traffic; looser tolerance due to bf16 rounding).
    out_bf16 = gcn_dgi_forward(seq, adj, weight, bias, alpha,
                               compute_dtype=jnp.bfloat16)
    jax.block_until_ready(out_bf16)
    assert out_bf16.shape == (B, N, F_out)
    assert jnp.allclose(out_bf16, ref, atol=5e-2, rtol=5e-2)

    print("KERNEL_OK")
</pallas_src>

<mosaic_0001>
module attributes {stable_mosaic.version = 11 : i64} {
  func.func @_gcn_dgi_kernel(%arg0: i32, %arg1: i32, %arg2: i32, %arg3: memref<1x16x8xf32, #tpu.memory_space<vmem>>, %arg4: memref<1x16x16xf32, #tpu.memory_space<vmem>>, %arg5: memref<8x128xf32, #tpu.memory_space<vmem>>, %arg6: memref<1x128xf32, #tpu.memory_space<vmem>>, %arg7: memref<1xf32, #tpu.memory_space<smem>>, %arg8: memref<1x16x128xf32, #tpu.memory_space<vmem>>, %arg9: memref<16x128xf32, #tpu.memory_space<vmem>>) attributes {dimension_semantics = [#tpu.dimension_semantics<parallel>, #tpu.dimension_semantics<parallel>, #tpu.dimension_semantics<arbitrary>], iteration_bounds = array<i64: 2, 1, 1>, scalar_prefetch = 0 : i64, scratch_operands = 1 : i64, tpu.core_type = #tpu.core_type<tc>, window_params = [{transform_indices = @transform_0, window_bounds = array<i64: 1, 16, 8>}, {transform_indices = @transform_1, window_bounds = array<i64: 1, 16, 16>}, {pipeline_mode = #tpu.pipeline_mode<synchronous>, transform_indices = @transform_2, window_bounds = array<i64: 8, 128>}, {pipeline_mode = #tpu.pipeline_mode<synchronous>, transform_indices = @transform_3, window_bounds = array<i64: 1, 128>}, {transform_indices = @transform_4, window_bounds = array<i64: 1>}, {transform_indices = @transform_5, window_bounds = array<i64: 1, 16, 128>}]} {
    %c0_i32 = arith.constant 0 : i32
    %0 = arith.cmpi eq, %arg2, %c0_i32 : i32
    %1 = arith.extui %0 : i1 to i32
    %c0_i32_0 = arith.constant 0 : i32
    %2 = arith.cmpi ne, %1, %c0_i32_0 : i32
    scf.if %2 {
      %c0_15 = arith.constant 0 : index
      %c0_16 = arith.constant 0 : index
      %16 = vector.load %arg6[%c0_15, %c0_16] : memref<1x128xf32, #tpu.memory_space<vmem>>, vector<1x128xf32>
      %17 = vector.shape_cast %16 : vector<1x128xf32> to vector<1x128xf32>
      %18 = vector.broadcast %17 : vector<1x128xf32> to vector<16x128xf32>
      %c0_17 = arith.constant 0 : index
      %c0_18 = arith.constant 0 : index
      %19 = vector.load %arg9[%c0_17, %c0_18] : memref<16x128xf32, #tpu.memory_space<vmem>>, vector<16x128xf32>
      tpu.vector_store %arg9[%c0_17, %c0_18], %18 {strides = array<i32>} : memref<16x128xf32, #tpu.memory_space<vmem>>, vector<16x128xf32>,
    } else {
    }
    %c0 = arith.constant 0 : index
    %c0_1 = arith.constant 0 : index
    %c0_2 = arith.constant 0 : index
    %3 = vector.load %arg3[%c0, %c0_1, %c0_2] : memref<1x16x8xf32, #tpu.memory_space<vmem>>, vector<1x16x8xf32>
    %4 = vector.shape_cast %3 : vector<1x16x8xf32> to vector<16x8xf32>
    %c0_3 = arith.constant 0 : index
    %c0_4 = arith.constant 0 : index
    %5 = vector.load %arg5[%c0_3, %c0_4] : memref<8x128xf32, #tpu.memory_space<vmem>>, vector<8x128xf32>
    %cst = arith.constant dense<0.000000e+00> : vector<16x128xf32>
    %6 = tpu.matmul %4, %5, %cst {dimension_numbers = #tpu.dot_dimension_numbers<[1], [0], [0], [1], [0, 0, 1, 1], [], []>} : vector<16x8xf32>, vector<8x128xf32>, vector<16x128xf32> -> vector<16x128xf32>
    %c0_5 = arith.constant 0 : index
    %c0_6 = arith.constant 0 : index
    %7 = vector.load %arg9[%c0_5, %c0_6] : memref<16x128xf32, #tpu.memory_space<vmem>>, vector<16x128xf32>
    %c0_7 = arith.constant 0 : index
    %c0_8 = arith.constant 0 : index
    %c0_9 = arith.constant 0 : index
    %8 = vector.load %arg4[%c0_7, %c0_8, %c0_9] : memref<1x16x16xf32, #tpu.memory_space<vmem>>, vector<1x16x16xf32>
    %9 = vector.shape_cast %8 : vector<1x16x16xf32> to vector<16x16xf32>
    %cst_10 = arith.constant dense<0.000000e+00> : vector<16x128xf32>
    %10 = tpu.matmul %9, %6, %cst_10 {dimension_numbers = #tpu.dot_dimension_numbers<[1], [0], [0], [1], [0, 0, 1, 1], [], []>} : vector<16x16xf32>, vector<16x128xf32>, vector<16x128xf32> -> vector<16x128xf32>
    %11 = arith.addf %7, %10 : vector<16x128xf32>
    %c0_11 = arith.constant 0 : index
    %c0_12 = arith.constant 0 : index
    %12 = vector.load %arg9[%c0_11, %c0_12] : memref<16x128xf32, #tpu.memory_space<vmem>>, vector<16x128xf32>
    tpu.vector_store %arg9[%c0_11, %c0_12], %11 {strides = array<i32>} : memref<16x128xf32, #tpu.memory_space<vmem>>, vector<16x128xf32>,
    %c0_i32_13 = arith.constant 0 : i32
    %13 = arith.cmpi eq, %arg2, %c0_i32_13 : i32
    %14 = arith.extui %13 : i1 to i32
    %c0_i32_14 = arith.constant 0 : i32
    %15 = arith.cmpi ne, %14, %c0_i32_14 : i32
    scf.if %15 {
      %c0_15 = arith.constant 0 : index
      %c0_16 = arith.constant 0 : index
      %16 = vector.load %arg9[%c0_15, %c0_16] : memref<16x128xf32, #tpu.memory_space<vmem>>, vector<16x128xf32>
      %c0_17 = arith.constant 0 : index
      %17 = memref.load %arg7[%c0_17] : memref<1xf32, #tpu.memory_space<smem>>
      %cst_18 = arith.constant 0.000000e+00 : f32
      %18 = vector.broadcast %cst_18 : f32 to vector<16x128xf32>
      %19 = arith.cmpf oge, %16, %18 : vector<16x128xf32>
      %20 = vector.broadcast %17 : f32 to vector<16x128xf32>
      %21 = arith.mulf %20, %16 : vector<16x128xf32>
      %22 = arith.select %19, %16, %21 : vector<16x128xi1>, vector<16x128xf32>
      %c0_19 = arith.constant 0 : index
      %c0_20 = arith.constant 0 : index
      %c0_21 = arith.constant 0 : index
      %23 = vector.load %arg8[%c0_19, %c0_20, %c0_21] : memref<1x16x128xf32, #tpu.memory_space<vmem>>, vector<1x16x128xf32>
      %24 = vector.shape_cast %23 : vector<1x16x128xf32> to vector<16x128xf32>
      %25 = vector.shape_cast %22 : vector<16x128xf32> to vector<1x16x128xf32>
      tpu.vector_store %arg8[%c0_19, %c0_20, %c0_21], %25 {strides = array<i32>} : memref<1x16x128xf32, #tpu.memory_space<vmem>>, vector<1x16x128xf32>,
    } else {
    }
    return
  }
  func.func @transform_0(%arg0: i32, %arg1: i32, %arg2: i32) -> (i32, i32, i32) {
    %c0_i32 = arith.constant 0 : i32
    %c0_i32_0 = arith.constant 0 : i32
    return %arg0, %arg2, %c0_i32 : i32, i32, i32
  }
  func.func @transform_1(%arg0: i32, %arg1: i32, %arg2: i32) -> (i32, i32, i32) {
    %c0_i32 = arith.constant 0 : i32
    return %arg0, %arg1, %arg2 : i32, i32, i32
  }
  func.func @transform_2(%arg0: i32, %arg1: i32, %arg2: i32) -> (i32, i32) {
    %c0_i32 = arith.constant 0 : i32
    %c0_i32_0 = arith.constant 0 : i32
    %c0_i32_1 = arith.constant 0 : i32
    return %c0_i32, %c0_i32_0 : i32, i32
  }
  func.func @transform_3(%arg0: i32, %arg1: i32, %arg2: i32) -> (i32, i32) {
    %c0_i32 = arith.constant 0 : i32
    %c0_i32_0 = arith.constant 0 : i32
    %c0_i32_1 = arith.constant 0 : i32
    return %c0_i32, %c0_i32_0 : i32, i32
  }
  func.func @transform_4(%arg0: i32, %arg1: i32, %arg2: i32) -> i32 {
    %c0_i32 = arith.constant 0 : i32
    %c0_i32_0 = arith.constant 0 : i32
    return %c0_i32 : i32
  }
  func.func @transform_5(%arg0: i32, %arg1: i32, %arg2: i32) -> (i32, i32, i32) {
    %c0_i32 = arith.constant 0 : i32
    %c0_i32_0 = arith.constant 0 : i32
    return %arg0, %arg1, %c0_i32 : i32, i32, i32
  }
}

</mosaic_0001>

<llo_original>
// kernel: tpu_custom_call.1
$region0: #{tpu_custom_call.1}
  #allocation0 [shape = 'u32[]', space=smem, size = 0x4, offset = 0x4, fixed_abs, tag = 'smem constant byte address 0x4 - core index']
  #allocation1 [shape = 'u32[72,128]{1,0:T(1,128)}', space=vmem, size = 0x9000, scoped, tag = 'internal scratch']
  #allocation2 [shape = 'f32[16,128]{1,0:T(8,128)}', space=vmem, size = 0x2000, scoped, tag = 'scratch operand']
  #allocation3 [shape = 'f32[1]{0:T(128)S(6)}', space=smem, size = 0x200, scoped, tag = 'scoped memory for tpu_custom_call.1']
  %s0 = inlined_call_operand.vmem [shape: f32[2,16,8], index: 0, kind: input, shape index: {}]
  %s1 = inlined_call_operand.vmem [shape: f32[2,16,16], index: 1, kind: input, shape index: {}]
  %s2 = inlined_call_operand.vmem [shape: f32[8,128], index: 2, kind: input, shape index: {}]
  %s3 = inlined_call_operand.vmem [shape: f32[1,128], index: 3, kind: input, shape index: {}]
  %s4 = inlined_call_operand.<no memory space> [shape: f32[1], index: 4, kind: input, shape index: {}]
  %s5 = inlined_call_operand.hbm [shape: f32[2,16,128], index: 5, kind: output, shape index: {}]
  %s6 = sld [smem:[#allocation0]]
  $region61: #{tpu_custom_call.1} parent=0
    _
  %s8 = ssub.s32 1, %s6
  %s9 = scalar_select 0, %s8, %s6
  %10 = sst [smem:[#allocation3]] %s4
  $region1: #{tpu_custom_call.1} parent=0
    #allocation4 [shape = 'u8[16384]{0}', space=vmem, size = 0x4000, scoped, tag = 'output window, operand 0']
    #allocation5 [shape = 's32[2]{0}', space=sflag, size = 0x8, scoped, tag = 'scoped memory for tpu_custom_call.1']
    %11 = vsyncpa [#allocation5], 0
    %s12 = scalar_lea.sflag [#allocation5], 1
    %13 = vsyncpa %s12, 0
    loop: start=0, step=1, limit=4
    $region2: #{tpu_custom_call.1} parent=1 // loop_pre_header
      _
    $region3: #{tpu_custom_call.1} parent=1 // loop_header
      %s15 = sphi 0, %s19
      %p16 = scmp.ge.s32.totalorder %s15, 4
      %s22 = sphi 0, %s41
      %s23 = sphi 0, %s37
      %s24 = sphi 0, %s33
      %s25 = sphi 0, %s22
      %s26 = sphi 0, %s23
      %s27 = sphi 0, %s24
      %s28 = sphi 0, %s25
      %s29 = sphi 0, %s26
      %s30 = sphi 0, %s27
      %s46 = sphi 0, %s48
      %s49 = sphi 0, %s46
      %s50 = sphi 0, %s49
      %s66 = sphi 0, %s50
      %s76 = sphi 0, %s78
      %s79 = sphi 0, %s76
      %s80 = sphi 0, %s79
      %s96 = sphi 0, %s80
      %s100 = sphi 0, %s100
      %s102 = sphi 0, %s100
      %s103 = sphi 0, %s102
      %s117 = sphi 0, %s103
      %s121 = sphi 0, %s121
      %s123 = sphi 0, %s121
      %s124 = sphi 0, %s123
      %s138 = sphi 0, %s124
      %s142 = sphi 0, %s142
      %s144 = sphi 0, %s142
      %s145 = sphi 0, %s144
      %s159 = sphi 0, %s145
      %s167 = sphi 0, %s169
      %s170 = sphi 0, %s167
      %s171 = sphi 0, %s170
      %s187 = sphi 0, %s171
    $region4: #{tpu_custom_call.1} parent=1 // loop_header_branch
      %18 = sbr.rel (%p16) target = $region8
    $region5: #{tpu_custom_call.1} parent=1 // loop_body
      %s20 = ssub.s32 %s15, 1
      %s21 = ssub.s32 %s15, 2
      %s31 = sadd.s32 1, %s24
      %p32 = scmp.ge.s32.totalorder %s31, 1
      %s33 = scalar_select %p32, 0, %s31
      %s34 = sadd.s32 1, %s23
      %s35 = scalar_select %p32, %s34, %s23
      %p36 = scmp.ge.s32.totalorder %s35, 1
      %s37 = scalar_select %p36, 0, %s35
      %s38 = sadd.s32 1, %s22
      %s39 = scalar_select %p36, %s38, %s22
      %p40 = scmp.ge.s32.totalorder %s39, 2
      %s41 = scalar_select %p40, 0, %s39
      %s42 = ssub.s32 %s22, %s41
      %s43 = ssub.s32 %s24, %s33
      %s44 = sor.u32 %s42, %s43
      %p45 = scmp.eq.s32.totalorder %s44, 0
      %s47 = sadd.s32 %s46, 1
      %s48 = scalar_select %p45, %s46, %s47
      %p51 = pneg %p45
      %p52 = scmp.eq.s32.totalorder %s15, 1
      %p53 = por %p51, %p52
      %p54 = scmp.ne.s32.totalorder %s46, %s49
      %p55 = scmp.eq.s32.totalorder %s15, 0
      %p56 = por %p54, %p55
      %p57 = scmp.ne.s32.totalorder %s46, %s49
      %p58 = scmp.eq.s32.totalorder %s20, 1
      %p59 = por %p57, %p58
      %p60 = scmp.ne.s32.totalorder %s49, %s50
      %p61 = scmp.eq.s32.totalorder %s20, 0
      %p62 = por %p60, %p61
      %p63 = scmp.ne.s32.totalorder %s49, %s50
      %p64 = scmp.eq.s32.totalorder %s21, 1
      %p65 = por %p63, %p64
      %p67 = scmp.ne.s32.totalorder %s50, %s66
      %p68 = scmp.eq.s32.totalorder %s21, 0
      %p69 = por %p67, %p68
      %s70 = ssub.s32 %s22, %s41
      %s71 = ssub.s32 %s23, %s37
      %s72 = sor.u32 %s70, %s71
      %s73 = ssub.s32 %s24, %s33
      %s74 = sor.u32 %s72, %s73
      %p75 = scmp.eq.s32.totalorder %s74, 0
      %s77 = sadd.s32 %s76, 1
      %s78 = scalar_select %p75, %s76, %s77
      %p81 = pneg %p75
      %p82 = scmp.eq.s32.totalorder %s15, 1
      %p83 = por %p81, %p82
      %p84 = scmp.ne.s32.totalorder %s76, %s79
      %p85 = scmp.eq.s32.totalorder %s15, 0
      %p86 = por %p84, %p85
      %p87 = scmp.ne.s32.totalorder %s76, %s79
      %p88 = scmp.eq.s32.totalorder %s20, 1
      %p89 = por %p87, %p88
      %p90 = scmp.ne.s32.totalorder %s79, %s80
      %p91 = scmp.eq.s32.totalorder %s20, 0
      %p92 = por %p90, %p91
      %p93 = scmp.ne.s32.totalorder %s79, %s80
      %p94 = scmp.eq.s32.totalorder %s21, 1
      %p95 = por %p93, %p94
      %p97 = scmp.ne.s32.totalorder %s80, %s96
      %p98 = scmp.eq.s32.totalorder %s21, 0
      %p99 = por %p97, %p98
      %s101 = sadd.s32 %s100, 1
      %p104 = scmp.eq.s32.totalorder %s15, 1
      %p105 = scmp.ne.s32.totalorder %s100, %s102
      %p106 = scmp.eq.s32.totalorder %s15, 0
      %p107 = por %p105, %p106
      %p108 = scmp.ne.s32.totalorder %s100, %s102
      %p109 = scmp.eq.s32.totalorder %s20, 1
      %p110 = por %p108, %p109
      %p111 = scmp.ne.s32.totalorder %s102, %s103
      %p112 = scmp.eq.s32.totalorder %s20, 0
      %p113 = por %p111, %p112
      %p114 = scmp.ne.s32.totalorder %s102, %s103
      %p115 = scmp.eq.s32.totalorder %s21, 1
      %p116 = por %p114, %p115
      %p118 = scmp.ne.s32.totalorder %s103, %s117
      %p119 = scmp.eq.s32.totalorder %s21, 0
      %p120 = por %p118, %p119
      %s122 = sadd.s32 %s121, 1
      %p125 = scmp.eq.s32.totalorder %s15, 1
      %p126 = scmp.ne.s32.totalorder %s121, %s123
      %p127 = scmp.eq.s32.totalorder %s15, 0
      %p128 = por %p126, %p127
      %p129 = scmp.ne.s32.totalorder %s121, %s123
      %p130 = scmp.eq.s32.totalorder %s20, 1
      %p131 = por %p129, %p130
      %p132 = scmp.ne.s32.totalorder %s123, %s124
      %p133 = scmp.eq.s32.totalorder %s20, 0
      %p134 = por %p132, %p133
      %p135 = scmp.ne.s32.totalorder %s123, %s124
      %p136 = scmp.eq.s32.totalorder %s21, 1
      %p137 = por %p135, %p136
      %p139 = scmp.ne.s32.totalorder %s124, %s138
      %p140 = scmp.eq.s32.totalorder %s21, 0
      %p141 = por %p139, %p140
      %s143 = sadd.s32 %s142, 1
      %p146 = scmp.eq.s32.totalorder %s15, 1
      %p147 = scmp.ne.s32.totalorder %s142, %s144
      %p148 = scmp.eq.s32.totalorder %s15, 0
      %p149 = por %p147, %p148
      %p150 = scmp.ne.s32.totalorder %s142, %s144
      %p151 = scmp.eq.s32.totalorder %s20, 1
      %p152 = por %p150, %p151
      %p153 = scmp.ne.s32.totalorder %s144, %s145
      %p154 = scmp.eq.s32.totalorder %s20, 0
      %p155 = por %p153, %p154
      %p156 = scmp.ne.s32.totalorder %s144, %s145
      %p157 = scmp.eq.s32.totalorder %s21, 1
      %p158 = por %p156, %p157
      %p160 = scmp.ne.s32.totalorder %s145, %s159
      %p161 = scmp.eq.s32.totalorder %s21, 0
      %p162 = por %p160, %p161
      %s163 = ssub.s32 %s22, %s41
      %s164 = ssub.s32 %s23, %s37
      %s165 = sor.u32 %s163, %s164
      %p166 = scmp.eq.s32.totalorder %s165, 0
      %s168 = sadd.s32 %s167, 1
      %s169 = scalar_select %p166, %s167, %s168
      %p172 = pneg %p166
      %p173 = scmp.eq.s32.totalorder %s15, 1
      %p174 = por %p172, %p173
      %p175 = scmp.ne.s32.totalorder %s167, %s170
      %p176 = scmp.eq.s32.totalorder %s15, 0
      %p177 = por %p175, %p176
      %p178 = scmp.ne.s32.totalorder %s167, %s170
      %p179 = scmp.eq.s32.totalorder %s20, 1
      %p180 = por %p178, %p179
      %p181 = scmp.ne.s32.totalorder %s170, %s171
      %p182 = scmp.eq.s32.totalorder %s20, 0
      %p183 = por %p181, %p182
      %p184 = scmp.ne.s32.totalorder %s170, %s171
      %p185 = scmp.eq.s32.totalorder %s21, 1
      %p186 = por %p184, %p185
      %p188 = scmp.ne.s32.totalorder %s171, %s187
      %p189 = scmp.eq.s32.totalorder %s21, 0
      %p190 = por %p188, %p189
      %p191 = scmp.le.s32.totalorder 1, %s15
      %p192 = scmp.lt.s32.totalorder %s15, 3
      %p193 = pnand %p191, %p192
      %p194 = pneg %p193
      // Predicated region
      $region9: #{tpu_custom_call.1} parent=5 // pred_check
        _
      $region10: #{tpu_custom_call.1} parent=5 // pred_check_branch
        %196 = sbr.rel (%p193) target = $region12
      $region11: #{tpu_custom_call.1} parent=5 // pred_region
        %s197 = ssub.s32 %s15, 1
        // Predicated region
        $region13: #{tpu_custom_call.1} parent=11 // pred_check
          %p198 = pneg %p113
        $region14: #{tpu_custom_call.1} parent=11 // pred_check_branch
          %200 = sbr.rel (%p198) target = $region16
        $region15: #{tpu_custom_call.1} parent=11 // pred_region
          _
        $region16: #{tpu_custom_call.1} parent=11 // pred_fallthru
          _
        // Predicated region
        $region17: #{tpu_custom_call.1} parent=11 // pred_check
          %p201 = pneg %p134
        $region18: #{tpu_custom_call.1} parent=11 // pred_check_branch
          %203 = sbr.rel (%p201) target = $region20
        $region19: #{tpu_custom_call.1} parent=11 // pred_region
          _
        $region20: #{tpu_custom_call.1} parent=11 // pred_fallthru
          _
        // Predicated region
        $region21: #{tpu_custom_call.1} parent=11 // pred_check
          %p204 = pneg %p155
        $region22: #{tpu_custom_call.1} parent=11 // pred_check_branch
          %206 = sbr.rel (%p204) target = $region24
        $region23: #{tpu_custom_call.1} parent=11 // pred_region
          _
        $region24: #{tpu_custom_call.1} parent=11 // pred_fallthru
          _
      $region12: #{tpu_custom_call.1} parent=5 // pred_fallthru
        _
      %p207 = scmp.lt.s32.totalorder %s15, 2
      // Predicated region
      $region25: #{tpu_custom_call.1} parent=5 // pred_check
        %p208 = pneg %p207
      $region26: #{tpu_custom_call.1} parent=5 // pred_check_branch
        %210 = sbr.rel (%p208) target = $region28
      $region27: #{tpu_custom_call.1} parent=5 // pred_region
        // Predicated region
        $region29: #{tpu_custom_call.1} parent=27 // pred_check
          %p211 = pneg %p56
        $region30: #{tpu_custom_call.1} parent=27 // pred_check_branch
          %213 = sbr.rel (%p211) target = $region32
        $region31: #{tpu_custom_call.1} parent=27 // pred_region
          %s214 = smul.u32 2, %s24
          %p215 = scmp.lt.s32.totalorder %s22, 1
          %s216 = scalar_select %p215, %s22, 1
          %p217 = scmp.lt.s32.totalorder %s214, 1
          %s218 = scalar_select %p217, %s214, 1
          %s219 = smul.addr %s216, 2
          %s220 = sadd.s32 %s218, %s219
          %s221 = smul.addr %s220, 8
          %s222 = scalar_lea.vmem %s0, %s221
          %s223 = smul.u32 2, %s24
        $region32: #{tpu_custom_call.1} parent=27 // pred_fallthru
          _
        // Predicated region
        $region33: #{tpu_custom_call.1} parent=27 // pred_check
          %p224 = pneg %p86
        $region34: #{tpu_custom_call.1} parent=27 // pred_check_branch
          %226 = sbr.rel (%p224) target = $region36
        $region35: #{tpu_custom_call.1} parent=27 // pred_region
          %s227 = smul.u32 2, %s23
          %p228 = scmp.lt.s32.totalorder %s22, 1
          %s229 = scalar_select %p228, %s22, 1
          %p230 = scmp.lt.s32.totalorder %s227, 1
          %s231 = scalar_select %p230, %s227, 1
          %p232 = scmp.lt.s32.totalorder %s24, 0
          %s233 = scalar_select %p232, %s24, 0
          %s234 = sadd.s32 %s233, %s231
          %s235 = smul.addr %s229, 2
          %s236 = sadd.s32 %s234, %s235
          %s237 = smul.addr %s236, 8
          %s238 = scalar_lea.vmem %s1, %s237
          %s239 = smul.u32 2, %s23
        $region36: #{tpu_custom_call.1} parent=27 // pred_fallthru
          _
      $region28: #{tpu_custom_call.1} parent=5 // pred_fallthru
        _
      %p240 = scmp.le.s32.totalorder 1, %s15
      %p241 = scmp.lt.s32.totalorder %s15, 3
      %p242 = pnand %p240, %p241
      %p243 = pneg %p242
      // Predicated region
      $region37: #{tpu_custom_call.1} parent=5 // pred_check
        _
      $region38: #{tpu_custom_call.1} parent=5 // pred_check_branch
        %245 = sbr.rel (%p242) target = $region40
      $region39: #{tpu_custom_call.1} parent=5 // pred_region
        %s246 = ssub.s32 %s15, 1
        %s247 = smul.u32 2, %s27
        %p248 = scmp.lt.s32.totalorder %s25, 1
        %s249 = scalar_select %p248, %s25, 1
        %p250 = scmp.lt.s32.totalorder %s247, 1
        %s251 = scalar_select %p250, %s247, 1
        %s252 = smul.addr %s249, 2
        %s253 = sadd.s32 %s251, %s252
        %s254 = smul.addr %s253, 8
        %s255 = scalar_lea.vmem %s0, %s254
        %p256 = pneg %p62
        %p257 = pneg %p59
        %s258 = smul.u32 2, %s26
        %p259 = scmp.lt.s32.totalorder %s25, 1
        %s260 = scalar_select %p259, %s25, 1
        %p261 = scmp.lt.s32.totalorder %s258, 1
        %s262 = scalar_select %p261, %s258, 1
        %p263 = scmp.lt.s32.totalorder %s27, 0
        %s264 = scalar_select %p263, %s27, 0
        %s265 = sadd.s32 %s264, %s262
        %s266 = smul.addr %s260, 2
        %s267 = sadd.s32 %s265, %s266
        %s268 = smul.addr %s267, 8
        %s269 = scalar_lea.vmem %s1, %s268
        %p270 = pneg %p92
        %p271 = pneg %p89
        %p272 = pneg %p113
        %p273 = pneg %p110
        %p274 = pneg %p134
        %p275 = pneg %p131
        %p276 = pneg %p155
        %p277 = pneg %p152
        %p278 = pneg %p183
        %p279 = pneg %p180
        %s280 = sand.u32 %s170, 1
        %s281 = scalar_lea.sflag [#allocation5], %s280
        %s282 = sand.u32 %s170, 1
        %s283 = smul.addr %s282, 16
        %s284 = scalar_lea.vmem [#allocation4], %s283
        %s285 = smul.u32 2, %s27
        %p286 = scmp.lt.s32.totalorder %s25, 1
        %s287 = scalar_select %p286, %s25, 1
        %p288 = scmp.lt.s32.totalorder %s285, 1
        %s289 = scalar_select %p288, %s285, 1
        %s290 = smul.addr %s287, 2
        %s291 = sadd.s32 %s289, %s290
        %s292 = smul.addr %s291, 8
        %s293 = scalar_lea.vmem %s0, %s292
        %s294 = smul.u32 2, %s27
        %s295 = smul.u32 2, %s26
        %p296 = scmp.lt.s32.totalorder %s25, 1
        %s297 = scalar_select %p296, %s25, 1
        %p298 = scmp.lt.s32.totalorder %s295, 1
        %s299 = scalar_select %p298, %s295, 1
        %p300 = scmp.lt.s32.totalorder %s27, 0
        %s301 = scalar_select %p300, %s27, 0
        %s302 = sadd.s32 %s301, %s299
        %s303 = smul.addr %s297, 2
        %s304 = sadd.s32 %s302, %s303
        %s305 = smul.addr %s304, 8
        %s306 = scalar_lea.vmem %s1, %s305
        %s307 = smul.u32 2, %s26
        %s308 = smul.u32 2, %s26
        %p309 = scmp.eq.s32.totalorder %s27, 0
        // Predicated region
        $region41: #{tpu_custom_call.1} parent=39 // pred_check
          %p310 = pneg %p309
        $region42: #{tpu_custom_call.1} parent=39 // pred_check_branch
          %312 = sbr.rel (%p310) target = $region44
        $region43: #{tpu_custom_call.1} parent=39 // pred_region
          %v313 = vld [vmem:[%s3] sm:$0x1]
          %v315 = vperm.slane %v313, 0
          %317 = vst [vmem:[#allocation2] sm:$0xff] %v315
          %318 = vst [vmem:[#allocation2 + $0x8] sm:$0xff] %v315
        $region44: #{tpu_custom_call.1} parent=39 // pred_fallthru
          _
        %v319 = vld [vmem:[%s293] sm:$0xff]
        %v320 = vld [vmem:[%s293 + $0x8] sm:$0xff]
        %v321 = vld [vmem:[%s2] sm:$0xff]
        %vm322 = vcmask 64512
        %v324 = vsel %vm322, %v319, 0
        %v327 = vsel %vm322, %v320, 0
        %329 = vmatpush.msra.mxu0 0.0
        %330 = vmatpush.msra.mxu0 0.0
        %331 = vmatpush.msra.mxu0 0.0
        %332 = vmatpush.msra.mxu0 0.0
        %333 = vmatpush.msra.mxu0 0.0
        %334 = vmatpush.msra.mxu0 0.0
        %335 = vmatpush.msra.mxu0 0.0
        %336 = vmatpush.msra.mxu0 0.0
        %337 = vmatpush.msra.mxu0 0.0
        %338 = vmatpush.msra.mxu0 0.0
        %339 = vmatpush.msra.mxu0 0.0
        %340 = vmatpush.msra.mxu0 0.0
        %341 = vmatpush.msra.mxu0 0.0
        %342 = vmatpush.msra.mxu0 0.0
        %343 = vmatpush.msra.mxu0 0.0
        %344 = vmatpush.msra.mxu0 %v321
        %345 = vmatmul.f32.gmra.mxu0 %v324
        %v346 = vpop.f32.mrf.mxu0
        %v347 = vadd.f32 0.0, %v346
        %348 = vmatmul.f32.gmra.mxu0 %v327
        %v349 = vpop.f32.mrf.mxu0
        %v350 = vadd.f32 0.0, %v349
        %351 = vdwg.mxu0
        %v352 = vld [vmem:[#allocation2] sm:$0xff]
        %v353 = vld [vmem:[#allocation2 + $0x8] sm:$0xff]
        %v354 = vld [vmem:[%s306] sm:$0xff]
        %v355 = vld [vmem:[%s306 + $0x8] sm:$0xff]
        %vm356 = vcmask 130048
        %v358 = vsel %vm356, %v354, 0
        %v361 = vsel %vm356, %v355, 0
        %363 = vmatpush.msra.mxu0 0.0
        %364 = vmatpush.msra.mxu0 0.0
        %365 = vmatpush.msra.mxu0 0.0
        %366 = vmatpush.msra.mxu0 0.0
        %367 = vmatpush.msra.mxu0 0.0
        %368 = vmatpush.msra.mxu0 0.0
        %369 = vmatpush.msra.mxu0 0.0
        %370 = vmatpush.msra.mxu0 0.0
        %371 = vmatpush.msra.mxu0 0.0
        %372 = vmatpush.msra.mxu0 0.0
        %373 = vmatpush.msra.mxu0 0.0
        %374 = vmatpush.msra.mxu0 0.0
        %375 = vmatpush.msra.mxu0 0.0
        %376 = vmatpush.msra.mxu0 0.0
        %377 = vmatpush.msra.mxu0 %v350
        %378 = vmatpush.msra.mxu0 %v347
        %379 = vmatmul.f32.gmra.mxu0 %v358
        %v380 = vpop.f32.mrf.mxu0
        %v381 = vadd.f32 0.0, %v380
        %382 = vmatmul.f32.gmra.mxu0 %v361
        %v383 = vpop.f32.mrf.mxu0
        %v384 = vadd.f32 0.0, %v383
        %385 = vdwg.mxu0
        %v386 = vadd.f32 %v352, %v381
        %v387 = vadd.f32 %v353, %v384
        %388 = vst [vmem:[#allocation2] sm:$0xff] %v386
        %389 = vst [vmem:[#allocation2 + $0x8] sm:$0xff] %v387
        // Predicated region
        $region45: #{tpu_custom_call.1} parent=39 // pred_check
          %p390 = pneg %p309
        $region46: #{tpu_custom_call.1} parent=39 // pred_check_branch
          %392 = sbr.rel (%p390) target = $region48
        $region47: #{tpu_custom_call.1} parent=39 // pred_region
          %v393 = vld [vmem:[#allocation2] sm:$0xff]
          %v394 = vld [vmem:[#allocation2 + $0x8] sm:$0xff]
          %s395 = sld [smem:[#allocation3]]
          %vm396 = vcmp.ge.f32.partialorder %v393, 0.0
          %vm397 = vcmp.ge.f32.partialorder %v394, 0.0
          %v398 = vstv %s395
          %v399 = vmul.f32 %v398, %v393
          %v400 = vmul.f32 %v398, %v394
          %v401 = vsel %vm396, %v393, %v399
          %v402 = vsel %vm397, %v394, %v400
          %403 = vst [vmem:[%s284] sm:$0xff] %v401
          %404 = vst [vmem:[%s284 + $0x8] sm:$0xff] %v402
        $region48: #{tpu_custom_call.1} parent=39 // pred_fallthru
          _
        %s405 = sand.u32 %s170, 1
        %s406 = scalar_lea.sflag [#allocation5], %s405
        %s407 = sand.u32 %s170, 1
        %s408 = smul.addr %s407, 16
        %s409 = scalar_lea.vmem [#allocation4], %s408
        // Predicated region
        $region49: #{tpu_custom_call.1} parent=39 // pred_check
          %p410 = pneg %p180
        $region50: #{tpu_custom_call.1} parent=39 // pred_check_branch
          %412 = sbr.rel (%p410) target = $region52
        $region51: #{tpu_custom_call.1} parent=39 // pred_region
          %s413 = smul.u32 2, %s26
          %415 = vsyncadd %s406, 0
          %s416 = smul.addr %s25, 2
          %s417 = sadd.s32 %s413, %s416
          %s418 = smul.addr %s417, 8
          %s419 = scalar_lea.hbm %s5, %s418
          %s420 = sshll.u32 %s409, 4
          %s421 = int_to_ptr.vmem [resolvable:$true] %s420
          %s422 = sshll.u32 %s419, 4
          %s423 = int_to_ptr.hbm [resolvable:$true] %s422
          %428 = dma.vmem_to_hbm [thread:$0]  %s421, 256, %s423, %s406, 128, 128, 8
        $region52: #{tpu_custom_call.1} parent=39 // pred_fallthru
          _
      $region40: #{tpu_custom_call.1} parent=5 // pred_fallthru
        _
      %p429 = scmp.le.s32.totalorder 2, %s15
      // Predicated region
      $region53: #{tpu_custom_call.1} parent=5 // pred_check
        %p430 = pneg %p429
      $region54: #{tpu_custom_call.1} parent=5 // pred_check_branch
        %432 = sbr.rel (%p430) target = $region56
      $region55: #{tpu_custom_call.1} parent=5 // pred_region
        %s433 = ssub.s32 %s15, 2
        // Predicated region
        $region57: #{tpu_custom_call.1} parent=55 // pred_check
          %p434 = pneg %p186
        $region58: #{tpu_custom_call.1} parent=55 // pred_check_branch
          %436 = sbr.rel (%p434) target = $region60
        $region59: #{tpu_custom_call.1} parent=55 // pred_region
          %s437 = sand.u32 %s171, 1
          %s438 = scalar_lea.sflag [#allocation5], %s437
          %s439 = sand.u32 %s171, 1
          %s440 = smul.addr %s439, 16
          %s441 = scalar_lea.vmem [#allocation4], %s440
          %443 = dma.done %s438, 256
        $region60: #{tpu_custom_call.1} parent=55 // pred_fallthru
          _
      $region56: #{tpu_custom_call.1} parent=5 // pred_fallthru
        _
    $region6: #{tpu_custom_call.1} parent=1 // loop_footer
      %s19 = sadd.s32 1, %s15
    $region7: #{tpu_custom_call.1} parent=1 // loop_footer_branch
      %14 = sbr.rel target = $region3
    $region8: #{tpu_custom_call.1} parent=1 // loop_exit
      _
    %444 = vsyncpa [#allocation5], 1
    %s445 = scalar_lea.sflag [#allocation5], 1
    %446 = vsyncpa %s445, 1

</llo_original>
